<compile_context>
chip_gen: v7x
topology: tpu7x:2x2x1
jax: 0.10.0
libtpu: 0.0.40
codegen_flags: <defaults>
</compile_context>

<pallas_src>
import functools

import jax
import jax.numpy as jnp
from jax import lax
from jax.experimental import pallas as pl
from jax.experimental.pallas import tpu as pltpu


# ---------------------------------------------------------------------------
# Wrapper-side weight transform: 3x3 HWIO conv -> row block-Toeplitz matrix.
# ---------------------------------------------------------------------------
def _row_toeplitz(w_hwio, W):
    """(3, 3, Cin, Cout) HWIO weights -> (3*W*Cin, W*Cout) Toeplitz matrix.

    Row index    : dy*(W*Cin) + w_in*Cin + ci
    Column index : w_out*Cout + co
    Entry        : w[dy, w_in - w_out + 1, ci, co] if that dx tap exists else 0
    so that   conv_row(h) = [row(h-1), row(h), row(h+1)] @ T   (pad=1, stride=1).
    """
    KH, KW, Cin, Cout = w_hwio.shape
    w_in = jnp.arange(W)[:, None]                    # (W, 1)
    w_out = jnp.arange(W)[None, :]                   # (1, W)
    dx = w_in - w_out + (KW // 2)                    # (W, W)
    valid = (dx >= 0) & (dx < KW)
    dx_c = jnp.clip(dx, 0, KW - 1)
    g = w_hwio[:, dx_c]                              # (KH, W_in, W_out, Cin, Cout)
    g = jnp.where(valid[None, :, :, None, None], g, 0.0)
    g = jnp.transpose(g, (0, 1, 3, 2, 4))            # (KH, W_in, Cin, W_out, Cout)
    return g.reshape(KH * W * Cin, W * Cout)


# ---------------------------------------------------------------------------
# Fused kernel: conv1+bn1+relu+conv2+bn2+residual+relu, all on-chip.
# Activations live as 2-D (M, W*C) slabs, M = b_tile * H image rows.
# ---------------------------------------------------------------------------
def fused_basic_block_kernel(x_ref, wts_ref, sb_ref, o_ref, *, H):
    M, WC = x_ref.shape                       # M = b_tile * H, WC = W * C
    cdt = wts_ref.dtype                       # MXU compute dtype (e.g. bf16)

    xin = x_ref[...]                          # loaded once, native dtype
    x_f32 = xin.astype(jnp.float32)           # residual path stays f32
    w1 = wts_ref[0]                           # (3*WC, WC), hoisted loads
    w2 = wts_ref[1]
    sb = sb_ref[...]                          # (4, WC) f32: s1, b1, s2, b2

    # Image-row border masks (h == 0 / h == H-1); built once, reused by both
    # convs.  Rows hitting these masks are exactly the rows that would
    # otherwise pick up wrap-around / cross-image data from the roll.
    h = lax.broadcasted_iota(jnp.int32, (M, WC), 0) % H
    not_top = h != 0
    not_bot = h != (H - 1)

    def conv_bn(act, w, scale, bias):
        a = act.astype(cdt)
        up = jnp.where(not_top, pltpu.roll(a, shift=1, axis=0),
                       jnp.zeros_like(a))                       # row h-1 (or 0)
        dn = jnp.where(not_bot, pltpu.roll(a, shift=M - 1, axis=0),
                       jnp.zeros_like(a))                       # row h+1 (or 0)
        patch = jnp.concatenate([up, a, dn], axis=-1)           # (M, 3*WC)
        out = jnp.dot(patch, w, preferred_element_type=jnp.float32)
        return out * scale + bias                               # (M, WC) f32

    out1 = jnp.maximum(conv_bn(xin, w1, sb[0:1], sb[1:2]), 0.0)   # stays in VMEM/vregs
    out2 = conv_bn(out1, w2, sb[2:3], sb[3:4])
    o_ref[...] = jnp.maximum(out2 + x_f32, 0.0).astype(o_ref.dtype)


# ---------------------------------------------------------------------------
# Wrapper: one fused pallas_call, grid over batch tiles.
# ---------------------------------------------------------------------------
@functools.partial(jax.jit, static_argnames=("compute_dtype", "b_tile"))
def basic_block_forward_nhwc(x, w1_hwio, s1, b1, w2_hwio, s2, b2,
                             *, compute_dtype=jnp.bfloat16, b_tile=None):
    """BasicBlock forward on NHWC activations. Returns NHWC float32."""
    N, H, W, Cin = x.shape
    Cout = w1_hwio.shape[-1]
    assert w1_hwio.shape == (3, 3, Cin, Cout), w1_hwio.shape
    assert w2_hwio.shape == (3, 3, Cout, Cout), w2_hwio.shape
    assert Cin == Cout, "stride=1 / downsample=None requires inplanes == planes"
    WC, WCo = W * Cin, W * Cout

    if b_tile is None:
        # ~256 rows per grid step to amortize the ~0.35us/step overhead, but
        # keep the parallel grid extent >= 2 when N >= 2 (v7x has 2 TCs).
        cap = max(1, 256 // H)
        b_tile = max(1, min(cap, N // 2 if N >= 2 else N))
        while N % b_tile:
            b_tile -= 1
    if (b_tile * H) % 8 != 0:
        b_tile = N                     # fall back to one full, trivially-aligned block

    # Row block-Toeplitz weights (one K = 3*W*C matmul per conv), cast ONCE.
    wts = jnp.stack([_row_toeplitz(w1_hwio, W),
                     _row_toeplitz(w2_hwio, W)]).astype(compute_dtype)  # (2, 3*WC, WCo)

    # Folded BN scale/bias, tiled across W so they broadcast over the (M, WCo)
    # matmul output; merged into a single tiny input (one DMA descriptor).
    sb = jnp.stack([jnp.tile(s1, W), jnp.tile(b1, W),
                    jnp.tile(s2, W), jnp.tile(b2, W)]).astype(jnp.float32)  # (4, WCo)

    # Lane-dense activation slab: free row-major reshape, native dtype.
    x2 = x.reshape(N * H, WC)

    out2 = pl.pallas_call(
        functools.partial(fused_basic_block_kernel, H=H),
        out_shape=jax.ShapeDtypeStruct((N * H, WCo), jnp.float32),
        grid=(N // b_tile,),
        in_specs=[
            pl.BlockSpec((b_tile * H, WC), lambda n: (n, 0)),
            pl.BlockSpec((2, 3 * WC, WCo), lambda n: (0, 0, 0)),
            pl.BlockSpec((4, WCo), lambda n: (0, 0)),
        ],
        out_specs=pl.BlockSpec((b_tile * H, WCo), lambda n: (n, 0)),
        compiler_params=pltpu.CompilerParams(
            dimension_semantics=("parallel",)),
    )(x2, wts, sb)

    return out2.reshape(N, H, W, Cout)   # free row-major reshape back to NHWC


# ---------------------------------------------------------------------------
# Pure-JAX reference (NCHW, matching the PyTorch module) for correctness.
# ---------------------------------------------------------------------------
def basic_block_ref(x_nchw, w1_oihw, s1, b1, w2_oihw, s2, b2):
    dn = lax.conv_dimension_numbers(x_nchw.shape, w1_oihw.shape,
                                    ("NCHW", "OIHW", "NCHW"))
    out = lax.conv_general_dilated(x_nchw, w1_oihw, (1, 1), ((1, 1), (1, 1)),
                                   dimension_numbers=dn)
    out = out * s1[None, :, None, None] + b1[None, :, None, None]
    out = jnp.maximum(out, 0.0)
    out = lax.conv_general_dilated(out, w2_oihw, (1, 1), ((1, 1), (1, 1)),
                                   dimension_numbers=dn)
    out = out * s2[None, :, None, None] + b2[None, :, None, None]
    out = out + x_nchw
    return jnp.maximum(out, 0.0)


if __name__ == "__main__":
    # BasicBlock(inplanes=4, planes=4, stride=1, downsample=None)
    N, C, H, W = 2, 4, 16, 16
    inplanes = planes = C
    eps = 1e-5

    key = jax.random.PRNGKey(0)
    k = jax.random.split(key, 8)

    # Input in PyTorch NCHW convention.
    x_nchw = jax.random.normal(k[0], (N, C, H, W), dtype=jnp.float32)

    # Conv weights (PyTorch OIHW layout), deterministic init.
    w1_oihw = jax.random.normal(k[1], (planes, inplanes, 3, 3), jnp.float32) * 0.1
    w2_oihw = jax.random.normal(k[2], (planes, planes, 3, 3), jnp.float32) * 0.1

    # BatchNorm (eval mode) parameters, folded into per-channel scale/bias.
    gamma1 = 1.0 + 0.1 * jax.random.normal(k[3], (planes,), jnp.float32)
    beta1 = 0.1 * jax.random.normal(k[4], (planes,), jnp.float32)
    mean1 = 0.05 * jnp.arange(planes, dtype=jnp.float32)
    var1 = 1.0 + 0.02 * jnp.arange(planes, dtype=jnp.float32)
    gamma2 = 1.0 + 0.1 * jax.random.normal(k[5], (planes,), jnp.float32)
    beta2 = 0.1 * jax.random.normal(k[6], (planes,), jnp.float32)
    mean2 = -0.03 * jnp.arange(planes, dtype=jnp.float32)
    var2 = 1.0 + 0.01 * jnp.arange(planes, dtype=jnp.float32)

    s1 = gamma1 / jnp.sqrt(var1 + eps)
    b1 = beta1 - mean1 * s1
    s2 = gamma2 / jnp.sqrt(var2 + eps)
    b2 = beta2 - mean2 * s2

    # Kernel-side weight layout: HWIO.
    w1_hwio = jnp.transpose(w1_oihw, (2, 3, 1, 0))
    w2_hwio = jnp.transpose(w2_oihw, (2, 3, 1, 0))

    # Layout conversion once at the model boundary (kernel works in NHWC).
    x_nhwc = jnp.transpose(x_nchw, (0, 2, 3, 1))

    ref_nchw = basic_block_ref(x_nchw, w1_oihw, s1, b1, w2_oihw, s2, b2)
    ref_nhwc = jax.block_until_ready(jnp.transpose(ref_nchw, (0, 2, 3, 1)))

    # 1) float32 MXU path: tight tolerance.
    out_f32 = basic_block_forward_nhwc(x_nhwc, w1_hwio, s1, b1, w2_hwio, s2, b2,
                                       compute_dtype=jnp.float32)
    out_f32 = jax.block_until_ready(out_f32)
    assert out_f32.shape == (N, H, W, C), out_f32.shape
    err_f32 = float(jnp.max(jnp.abs(out_f32 - ref_nhwc)))
    assert jnp.allclose(out_f32, ref_nhwc, atol=1e-3, rtol=1e-3), err_f32

    # 2) default bfloat16 MXU path (f32 accumulation): looser tolerance.
    out_bf16 = basic_block_forward_nhwc(x_nhwc, w1_hwio, s1, b1, w2_hwio, s2, b2)
    out_bf16 = jax.block_until_ready(out_bf16)
    assert out_bf16.shape == (N, H, W, C), out_bf16.shape
    err_bf16 = float(jnp.max(jnp.abs(out_bf16 - ref_nhwc)))
    assert jnp.allclose(out_bf16, ref_nhwc, atol=3e-2, rtol=3e-2), err_bf16

    print("KERNEL_OK")
</pallas_src>

<mosaic_0001>
module attributes {stable_mosaic.version = 11 : i64} {
  func.func @fused_basic_block_kernel(%arg0: i32, %arg1: memref<16x64xf32, #tpu.memory_space<vmem>>, %arg2: memref<2x192x64xf32, #tpu.memory_space<vmem>>, %arg3: memref<4x64xf32, #tpu.memory_space<vmem>>, %arg4: memref<16x64xf32, #tpu.memory_space<vmem>>) attributes {dimension_semantics = [#tpu.dimension_semantics<parallel>], iteration_bounds = array<i64: 2>, scalar_prefetch = 0 : i64, scratch_operands = 0 : i64, tpu.core_type = #tpu.core_type<tc>, window_params = [{transform_indices = @transform_0, window_bounds = array<i64: 16, 64>}, {pipeline_mode = #tpu.pipeline_mode<synchronous>, transform_indices = @transform_1, window_bounds = array<i64: 2, 192, 64>}, {pipeline_mode = #tpu.pipeline_mode<synchronous>, transform_indices = @transform_2, window_bounds = array<i64: 4, 64>}, {transform_indices = @transform_3, window_bounds = array<i64: 16, 64>}]} {
    %c0 = arith.constant 0 : index
    %c0_0 = arith.constant 0 : index
    %0 = vector.load %arg1[%c0, %c0_0] : memref<16x64xf32, #tpu.memory_space<vmem>>, vector<16x64xf32>
    %c0_1 = arith.constant 0 : index
    %c0_2 = arith.constant 0 : index
    %c0_3 = arith.constant 0 : index
    %1 = vector.load %arg2[%c0_1, %c0_2, %c0_3] : memref<2x192x64xf32, #tpu.memory_space<vmem>>, vector<1x192x64xf32>
    %2 = vector.shape_cast %1 : vector<1x192x64xf32> to vector<192x64xf32>
    %c1 = arith.constant 1 : index
    %c0_4 = arith.constant 0 : index
    %c0_5 = arith.constant 0 : index
    %3 = vector.load %arg2[%c1, %c0_4, %c0_5] : memref<2x192x64xf32, #tpu.memory_space<vmem>>, vector<1x192x64xf32>
    %4 = vector.shape_cast %3 : vector<1x192x64xf32> to vector<192x64xf32>
    %c0_6 = arith.constant 0 : index
    %c0_7 = arith.constant 0 : index
    %5 = vector.load %arg3[%c0_6, %c0_7] : memref<4x64xf32, #tpu.memory_space<vmem>>, vector<4x64xf32>
    %6 = tpu.iota {dimensions = array<i32: 0>} : vector<16x64xi32>
    %c16_i32 = arith.constant 16 : i32
    %c0_i32 = arith.constant 0 : i32
    %7 = arith.cmpi eq, %c16_i32, %c0_i32 : i32
    %c1_i32 = arith.constant 1 : i32
    %8 = arith.select %7, %c1_i32, %c16_i32 : i32
    %9 = vector.broadcast %8 : i32 to vector<16x64xi32>
    %10 = arith.remsi %6, %9 : vector<16x64xi32>
    %c0_i32_8 = arith.constant 0 : i32
    %11 = vector.broadcast %c0_i32_8 : i32 to vector<16x64xi32>
    %12 = arith.cmpi ne, %10, %11 : vector<16x64xi32>
    %c0_i32_9 = arith.constant 0 : i32
    %13 = vector.broadcast %c0_i32_9 : i32 to vector<16x64xi32>
    %14 = arith.cmpi slt, %10, %13 : vector<16x64xi32>
    %c0_i32_10 = arith.constant 0 : i32
    %15 = arith.cmpi slt, %8, %c0_i32_10 : i32
    %16 = vector.broadcast %15 : i1 to vector<16x64xi1>
    %17 = vector.broadcast %16 : vector<16x64xi1> to vector<16x64xi1>
    %18 = arith.xori %14, %17 : vector<16x64xi1>
    %19 = arith.andi %18, %12 : vector<16x64xi1>
    %20 = vector.broadcast %8 : i32 to vector<16x64xi32>
    %21 = arith.addi %10, %20 : vector<16x64xi32>
    %22 = arith.select %19, %21, %10 : vector<16x64xi1>, vector<16x64xi32>
    %c0_i32_11 = arith.constant 0 : i32
    %23 = vector.broadcast %c0_i32_11 : i32 to vector<16x64xi32>
    %24 = arith.cmpi ne, %22, %23 : vector<16x64xi32>
    %c15_i32 = arith.constant 15 : i32
    %25 = vector.broadcast %c15_i32 : i32 to vector<16x64xi32>
    %26 = arith.cmpi ne, %22, %25 : vector<16x64xi32>
    %27 = vector.extract_strided_slice %5 {offsets = [0, 0], sizes = [1, 64], strides = [1, 1]} : vector<4x64xf32> to vector<1x64xf32>
    %28 = vector.extract_strided_slice %5 {offsets = [1, 0], sizes = [1, 64], strides = [1, 1]} : vector<4x64xf32> to vector<1x64xf32>
    %c1_i32_12 = arith.constant 1 : i32
    %29 = tpu.dynamic_rotate %0 by %c1_i32_12 dim 0 : vector<16x64xf32>, i32 -> vector<16x64xf32>
    %cst = arith.constant 0.000000e+00 : f32
    %30 = vector.broadcast %cst : f32 to vector<16x64xf32>
    %31 = arith.select %24, %29, %30 : vector<16x64xi1>, vector<16x64xf32>
    %c15_i32_13 = arith.constant 15 : i32
    %32 = tpu.dynamic_rotate %0 by %c15_i32_13 dim 0 : vector<16x64xf32>, i32 -> vector<16x64xf32>
    %cst_14 = arith.constant 0.000000e+00 : f32
    %33 = vector.broadcast %cst_14 : f32 to vector<16x64xf32>
    %34 = arith.select %26, %32, %33 : vector<16x64xi1>, vector<16x64xf32>
    %35 = tpu.concatenate %31, %0, %34 in 1 : vector<16x64xf32>, vector<16x64xf32>, vector<16x64xf32> -> vector<16x192xf32>
    %cst_15 = arith.constant dense<0.000000e+00> : vector<16x64xf32>
    %36 = tpu.matmul %35, %2, %cst_15 {dimension_numbers = #tpu.dot_dimension_numbers<[1], [0], [0], [1], [0, 0, 1, 1], [], []>} : vector<16x192xf32>, vector<192x64xf32>, vector<16x64xf32> -> vector<16x64xf32>
    %37 = vector.broadcast %27 : vector<1x64xf32> to vector<16x64xf32>
    %38 = arith.mulf %36, %37 : vector<16x64xf32>
    %39 = vector.broadcast %28 : vector<1x64xf32> to vector<16x64xf32>
    %40 = arith.addf %38, %39 : vector<16x64xf32>
    %cst_16 = arith.constant 0.000000e+00 : f32
    %41 = vector.broadcast %cst_16 : f32 to vector<16x64xf32>
    %42 = arith.maximumf %40, %41 : vector<16x64xf32>
    %43 = vector.extract_strided_slice %5 {offsets = [2, 0], sizes = [1, 64], strides = [1, 1]} : vector<4x64xf32> to vector<1x64xf32>
    %44 = vector.extract_strided_slice %5 {offsets = [3, 0], sizes = [1, 64], strides = [1, 1]} : vector<4x64xf32> to vector<1x64xf32>
    %c1_i32_17 = arith.constant 1 : i32
    %45 = tpu.dynamic_rotate %42 by %c1_i32_17 dim 0 : vector<16x64xf32>, i32 -> vector<16x64xf32>
    %cst_18 = arith.constant 0.000000e+00 : f32
    %46 = vector.broadcast %cst_18 : f32 to vector<16x64xf32>
    %47 = arith.select %24, %45, %46 : vector<16x64xi1>, vector<16x64xf32>
    %c15_i32_19 = arith.constant 15 : i32
    %48 = tpu.dynamic_rotate %42 by %c15_i32_19 dim 0 : vector<16x64xf32>, i32 -> vector<16x64xf32>
    %cst_20 = arith.constant 0.000000e+00 : f32
    %49 = vector.broadcast %cst_20 : f32 to vector<16x64xf32>
    %50 = arith.select %26, %48, %49 : vector<16x64xi1>, vector<16x64xf32>
    %51 = tpu.concatenate %47, %42, %50 in 1 : vector<16x64xf32>, vector<16x64xf32>, vector<16x64xf32> -> vector<16x192xf32>
    %cst_21 = arith.constant dense<0.000000e+00> : vector<16x64xf32>
    %52 = tpu.matmul %51, %4, %cst_21 {dimension_numbers = #tpu.dot_dimension_numbers<[1], [0], [0], [1], [0, 0, 1, 1], [], []>} : vector<16x192xf32>, vector<192x64xf32>, vector<16x64xf32> -> vector<16x64xf32>
    %53 = vector.broadcast %43 : vector<1x64xf32> to vector<16x64xf32>
    %54 = arith.mulf %52, %53 : vector<16x64xf32>
    %55 = vector.broadcast %44 : vector<1x64xf32> to vector<16x64xf32>
    %56 = arith.addf %54, %55 : vector<16x64xf32>
    %57 = arith.addf %56, %0 : vector<16x64xf32>
    %cst_22 = arith.constant 0.000000e+00 : f32
    %58 = vector.broadcast %cst_22 : f32 to vector<16x64xf32>
    %59 = arith.maximumf %57, %58 : vector<16x64xf32>
    %c0_23 = arith.constant 0 : index
    %c0_24 = arith.constant 0 : index
    %60 = vector.load %arg4[%c0_23, %c0_24] : memref<16x64xf32, #tpu.memory_space<vmem>>, vector<16x64xf32>
    tpu.vector_store %arg4[%c0_23, %c0_24], %59 {strides = array<i32>} : memref<16x64xf32, #tpu.memory_space<vmem>>, vector<16x64xf32>,
    return
  }
  func.func @transform_0(%arg0: i32) -> (i32, i32) {
    %c0_i32 = arith.constant 0 : i32
    %c0_i32_0 = arith.constant 0 : i32
    return %arg0, %c0_i32 : i32, i32
  }
  func.func @transform_1(%arg0: i32) -> (i32, i32, i32) {
    %c0_i32 = arith.constant 0 : i32
    %c0_i32_0 = arith.constant 0 : i32
    %c0_i32_1 = arith.constant 0 : i32
    %c0_i32_2 = arith.constant 0 : i32
    return %c0_i32, %c0_i32_0, %c0_i32_1 : i32, i32, i32
  }
  func.func @transform_2(%arg0: i32) -> (i32, i32) {
    %c0_i32 = arith.constant 0 : i32
    %c0_i32_0 = arith.constant 0 : i32
    %c0_i32_1 = arith.constant 0 : i32
    return %c0_i32, %c0_i32_0 : i32, i32
  }
  func.func @transform_3(%arg0: i32) -> (i32, i32) {
    %c0_i32 = arith.constant 0 : i32
    %c0_i32_0 = arith.constant 0 : i32
    return %arg0, %c0_i32 : i32, i32
  }
}

</mosaic_0001>

<llo_original>
// kernel: tile.23
$region0: #{tile.23}
  #allocation0 [shape = 's32[1]{0}', space=sflag, size = 0x4, scoped, tag = 'scoped memory for tile.23']
  %s0 = inlined_call_operand.vmem [shape: f32[4], index: 0, kind: input, shape index: {}]
  %s1 = inlined_call_operand.vmem [shape: f32[16,4], index: 1, kind: output, shape index: {}]
  // Predicated region
  $region2: #{tile.23} parent=0 // pred_check
    _
  $region3: #{tile.23} parent=0 // pred_check_branch
    %3 = sbr.rel (0) target = $region5
  $region4: #{tile.23} parent=0 // pred_region
    _
  $region5: #{tile.23} parent=0 // pred_fallthru
    _
  %v4 = vld [vmem:[%s0] ss:$0 sm:$0xff]
  %5 = vst [vmem:[%s1] sm:$0xff] %v4
  %s6 = scalar_lea.vmem %s1, 8
  %7 = vst [vmem:[%s6] sm:$0xff] %v4

// kernel: tile.36
$region0: #{tile.36}
  %s0 = inlined_call_operand.vmem [shape: f32[16,4], index: 0, kind: input, shape index: {}]
  %s1 = inlined_call_operand.vmem [shape: f32[1,64], index: 1, kind: output, shape index: {}]
  $region1: #{tile.36} parent=0
    #allocation0 [shape = 'u8[4096]{0}', space=vmem, size = 0x1000, scoped, tag = 'scoped mem for output reshape']
    %v2 = vld [vmem:[%s0] sm:$0x1]
    %vm3 = vcmask 31744
    %4 = vst.msk [vmem:[#allocation0] sm:$0x1] %vm3, %v2
    %s5 = scalar_lea.vmem %s0, 15
    %v6 = vld [vmem:[%s5] sm:$0x1]
    %7 = vrot.lane.b32.xlu0 %v6, 60
    %v8 = vpop.permute.xlu0 %7
    %vm9 = vcmask 523744
    %10 = vst.msk [vmem:[#allocation0] sm:$0x1] %vm9, %v8
    %s11 = scalar_lea.vmem %s0, 14
    %v12 = vld [vmem:[%s11] sm:$0x1]
    %13 = vrot.lane.b32.xlu0 %v12, 56
    %v14 = vpop.permute.xlu0 %13
    %vm15 = vcmask 490944
    %16 = vst.msk [vmem:[#allocation0] sm:$0x1] %vm15, %v14
    %s17 = scalar_lea.vmem %s0, 13
    %v18 = vld [vmem:[%s17] sm:$0x1]
    %19 = vrot.lane.b32.xlu0 %v18, 52
    %v20 = vpop.permute.xlu0 %19
    %vm21 = vcmask 458144
    %22 = vst.msk [vmem:[#allocation0] sm:$0x1] %vm21, %v20
    %s23 = scalar_lea.vmem %s0, 12
    %v24 = vld [vmem:[%s23] sm:$0x1]
    %25 = vrot.lane.b32.xlu0 %v24, 48
    %v26 = vpop.permute.xlu0 %25
    %vm27 = vcmask 425344
    %28 = vst.msk [vmem:[#allocation0] sm:$0x1] %vm27, %v26
    %s29 = scalar_lea.vmem %s0, 11
    %v30 = vld [vmem:[%s29] sm:$0x1]
    %31 = vrot.lane.b32.xlu0 %v30, 44
    %v32 = vpop.permute.xlu0 %31
    %vm33 = vcmask 392544
    %34 = vst.msk [vmem:[#allocation0] sm:$0x1] %vm33, %v32
    %s35 = scalar_lea.vmem %s0, 10
    %v36 = vld [vmem:[%s35] sm:$0x1]
    %37 = vrot.lane.b32.xlu0 %v36, 40
    %v38 = vpop.permute.xlu0 %37
    %vm39 = vcmask 359744
    %40 = vst.msk [vmem:[#allocation0] sm:$0x1] %vm39, %v38
    %s41 = scalar_lea.vmem %s0, 9
    %v42 = vld [vmem:[%s41] sm:$0x1]
    %43 = vrot.lane.b32.xlu0 %v42, 36
    %v44 = vpop.permute.xlu0 %43
    %vm45 = vcmask 326944
    %46 = vst.msk [vmem:[#allocation0] sm:$0x1] %vm45, %v44
    %s47 = scalar_lea.vmem %s0, 8
    %v48 = vld [vmem:[%s47] sm:$0x1]
    %49 = vrot.lane.b32.xlu0 %v48, 32
    %v50 = vpop.permute.xlu0 %49
    %vm51 = vcmask 294144
    %52 = vst.msk [vmem:[#allocation0] sm:$0x1] %vm51, %v50
    %s53 = scalar_lea.vmem %s0, 7
    %v54 = vld [vmem:[%s53] sm:$0x1]
    %55 = vrot.lane.b32.xlu0 %v54, 28
    %v56 = vpop.permute.xlu0 %55
    %vm57 = vcmask 261344
    %58 = vst.msk [vmem:[#allocation0] sm:$0x1] %vm57, %v56
    %s59 = scalar_lea.vmem %s0, 6
    %v60 = vld [vmem:[%s59] sm:$0x1]
    %61 = vrot.lane.b32.xlu0 %v60, 24
    %v62 = vpop.permute.xlu0 %61
    %vm63 = vcmask 228544
    %64 = vst.msk [vmem:[#allocation0] sm:$0x1] %vm63, %v62
    %s65 = scalar_lea.vmem %s0, 5
    %v66 = vld [vmem:[%s65] sm:$0x1]
    %67 = vrot.lane.b32.xlu0 %v66, 20
    %v68 = vpop.permute.xlu0 %67
    %vm69 = vcmask 195744
    %70 = vst.msk [vmem:[#allocation0] sm:$0x1] %vm69, %v68
    %s71 = scalar_lea.vmem %s0, 4
    %v72 = vld [vmem:[%s71] sm:$0x1]
    %73 = vrot.lane.b32.xlu0 %v72, 16
    %v74 = vpop.permute.xlu0 %73
    %vm75 = vcmask 162944
    %76 = vst.msk [vmem:[#allocation0] sm:$0x1] %vm75, %v74
    %s77 = scalar_lea.vmem %s0, 3
    %v78 = vld [vmem:[%s77] sm:$0x1]
    %79 = vrot.lane.b32.xlu0 %v78, 12
    %v80 = vpop.permute.xlu0 %79
    %vm81 = vcmask 130144
    %82 = vst.msk [vmem:[#allocation0] sm:$0x1] %vm81, %v80
    %s83 = scalar_lea.vmem %s0, 2
    %v84 = vld [vmem:[%s83] sm:$0x1]
    %85 = vrot.lane.b32.xlu0 %v84, 8
    %v86 = vpop.permute.xlu0 %85
    %vm87 = vcmask 97344
    %88 = vst.msk [vmem:[#allocation0] sm:$0x1] %vm87, %v86
    %s89 = scalar_lea.vmem %s0, 1
    %v90 = vld [vmem:[%s89] sm:$0x1]
    %91 = vrot.lane.b32.xlu0 %v90, 4
    %v92 = vpop.permute.xlu0 %91
    %vm93 = vcmask 64544
    %94 = vst.msk [vmem:[#allocation0] sm:$0x1] %vm93, %v92
    %s96 = sshllo.u32 0, 1
    %v98 = vld [vmem:[#allocation0] sm:%s96]
    %s99 = sshllo.u32 0, 1
    %100 = vst [vmem:[%s1] sm:%s99] %v98

// kernel: basic_block_forward_nhwc.1
$region0: #{basic_block_forward_nhwc.1}
  #allocation0 [shape = 'u32[]', space=smem, size = 0x4, offset = 0x4, fixed_abs, tag = 'smem constant byte address 0x4 - core index']
  #allocation1 [shape = 'u32[144,128]{1,0:T(1,128)}', space=vmem, size = 0x12000, scoped, tag = 'internal scratch']
  %s0 = inlined_call_operand.vmem [shape: f32[32,64], index: 0, kind: input, shape index: {}]
  %s1 = inlined_call_operand.vmem [shape: f32[2,192,64], index: 1, kind: input, shape index: {}]
  %s2 = inlined_call_operand.vmem [shape: f32[4,64], index: 2, kind: input, shape index: {}]
  %s3 = inlined_call_operand.vmem [shape: f32[32,64], index: 3, kind: output, shape index: {}]
  %s4 = sld [smem:[#allocation0]]
  $region45: #{basic_block_forward_nhwc.1} parent=0
    _
  %s6 = ssub.s32 1, %s4
  %s7 = scalar_select 0, %s6, %s4
  loop: start=0, step=1, limit=4
  $region2: #{basic_block_forward_nhwc.1} parent=0 // loop_pre_header
    _
  $region3: #{basic_block_forward_nhwc.1} parent=0 // loop_header
    %s9 = sphi 0, %s13
    %p10 = scmp.ge.s32.totalorder %s9, 4
    %s19 = sphi 0, %s21
    %s22 = sphi 0, %s19
    %s23 = sphi 0, %s22
    %s39 = sphi 0, %s23
    %s43 = sphi 0, %s43
    %s45 = sphi 0, %s43
    %s46 = sphi 0, %s45
    %s60 = sphi 0, %s46
    %s64 = sphi 0, %s64
    %s66 = sphi 0, %s64
    %s67 = sphi 0, %s66
    %s81 = sphi 0, %s67
    %s87 = sphi 0, %s89
    %s90 = sphi 0, %s87
    %s91 = sphi 0, %s90
    %s107 = sphi 0, %s91
  $region4: #{basic_block_forward_nhwc.1} parent=0 // loop_header_branch
    %12 = sbr.rel (%p10) target = $region8
  $region5: #{basic_block_forward_nhwc.1} parent=0 // loop_body
    %s14 = ssub.s32 %s9, 1
    %s15 = ssub.s32 %s9, 2
    %s16 = sadd.s32 %s9, 1
    %s17 = ssub.s32 %s9, %s16
    %p18 = scmp.eq.s32.totalorder %s17, 0
    %s20 = sadd.s32 %s19, 1
    %s21 = scalar_select %p18, %s19, %s20
    %p24 = pneg %p18
    %p25 = scmp.eq.s32.totalorder %s9, 1
    %p26 = por %p24, %p25
    %p27 = scmp.ne.s32.totalorder %s19, %s22
    %p28 = scmp.eq.s32.totalorder %s9, 0
    %p29 = por %p27, %p28
    %p30 = scmp.ne.s32.totalorder %s19, %s22
    %p31 = scmp.eq.s32.totalorder %s14, 1
    %p32 = por %p30, %p31
    %p33 = scmp.ne.s32.totalorder %s22, %s23
    %p34 = scmp.eq.s32.totalorder %s14, 0
    %p35 = por %p33, %p34
    %p36 = scmp.ne.s32.totalorder %s22, %s23
    %p37 = scmp.eq.s32.totalorder %s15, 1
    %p38 = por %p36, %p37
    %p40 = scmp.ne.s32.totalorder %s23, %s39
    %p41 = scmp.eq.s32.totalorder %s15, 0
    %p42 = por %p40, %p41
    %s44 = sadd.s32 %s43, 1
    %p47 = scmp.eq.s32.totalorder %s9, 1
    %p48 = scmp.ne.s32.totalorder %s43, %s45
    %p49 = scmp.eq.s32.totalorder %s9, 0
    %p50 = por %p48, %p49
    %p51 = scmp.ne.s32.totalorder %s43, %s45
    %p52 = scmp.eq.s32.totalorder %s14, 1
    %p53 = por %p51, %p52
    %p54 = scmp.ne.s32.totalorder %s45, %s46
    %p55 = scmp.eq.s32.totalorder %s14, 0
    %p56 = por %p54, %p55
    %p57 = scmp.ne.s32.totalorder %s45, %s46
    %p58 = scmp.eq.s32.totalorder %s15, 1
    %p59 = por %p57, %p58
    %p61 = scmp.ne.s32.totalorder %s46, %s60
    %p62 = scmp.eq.s32.totalorder %s15, 0
    %p63 = por %p61, %p62
    %s65 = sadd.s32 %s64, 1
    %p68 = scmp.eq.s32.totalorder %s9, 1
    %p69 = scmp.ne.s32.totalorder %s64, %s66
    %p70 = scmp.eq.s32.totalorder %s9, 0
    %p71 = por %p69, %p70
    %p72 = scmp.ne.s32.totalorder %s64, %s66
    %p73 = scmp.eq.s32.totalorder %s14, 1
    %p74 = por %p72, %p73
    %p75 = scmp.ne.s32.totalorder %s66, %s67
    %p76 = scmp.eq.s32.totalorder %s14, 0
    %p77 = por %p75, %p76
    %p78 = scmp.ne.s32.totalorder %s66, %s67
    %p79 = scmp.eq.s32.totalorder %s15, 1
    %p80 = por %p78, %p79
    %p82 = scmp.ne.s32.totalorder %s67, %s81
    %p83 = scmp.eq.s32.totalorder %s15, 0
    %p84 = por %p82, %p83
    %s85 = ssub.s32 %s9, %s16
    %p86 = scmp.eq.s32.totalorder %s85, 0
    %s88 = sadd.s32 %s87, 1
    %s89 = scalar_select %p86, %s87, %s88
    %p92 = pneg %p86
    %p93 = scmp.eq.s32.totalorder %s9, 1
    %p94 = por %p92, %p93
    %p95 = scmp.ne.s32.totalorder %s87, %s90
    %p96 = scmp.eq.s32.totalorder %s9, 0
    %p97 = por %p95, %p96
    %p98 = scmp.ne.s32.totalorder %s87, %s90
    %p99 = scmp.eq.s32.totalorder %s14, 1
    %p100 = por %p98, %p99
    %p101 = scmp.ne.s32.totalorder %s90, %s91
    %p102 = scmp.eq.s32.totalorder %s14, 0
    %p103 = por %p101, %p102
    %p104 = scmp.ne.s32.totalorder %s90, %s91
    %p105 = scmp.eq.s32.totalorder %s15, 1
    %p106 = por %p104, %p105
    %p108 = scmp.ne.s32.totalorder %s91, %s107
    %p109 = scmp.eq.s32.totalorder %s15, 0
    %p110 = por %p108, %p109
    %p111 = scmp.le.s32.totalorder 1, %s9
    %p112 = scmp.lt.s32.totalorder %s9, 3
    %p113 = pnand %p111, %p112
    %p114 = pneg %p113
    // Predicated region
    $region9: #{basic_block_forward_nhwc.1} parent=5 // pred_check
      _
    $region10: #{basic_block_forward_nhwc.1} parent=5 // pred_check_branch
      %116 = sbr.rel (%p113) target = $region12
    $region11: #{basic_block_forward_nhwc.1} parent=5 // pred_region
      %s117 = ssub.s32 %s9, 1
      // Predicated region
      $region13: #{basic_block_forward_nhwc.1} parent=11 // pred_check
        %p118 = pneg %p56
      $region14: #{basic_block_forward_nhwc.1} parent=11 // pred_check_branch
        %120 = sbr.rel (%p118) target = $region16
      $region15: #{basic_block_forward_nhwc.1} parent=11 // pred_region
        _
      $region16: #{basic_block_forward_nhwc.1} parent=11 // pred_fallthru
        _
      // Predicated region
      $region17: #{basic_block_forward_nhwc.1} parent=11 // pred_check
        %p121 = pneg %p77
      $region18: #{basic_block_forward_nhwc.1} parent=11 // pred_check_branch
        %123 = sbr.rel (%p121) target = $region20
      $region19: #{basic_block_forward_nhwc.1} parent=11 // pred_region
        _
      $region20: #{basic_block_forward_nhwc.1} parent=11 // pred_fallthru
        _
    $region12: #{basic_block_forward_nhwc.1} parent=5 // pred_fallthru
      _
    %p124 = scmp.lt.s32.totalorder %s9, 2
    // Predicated region
    $region21: #{basic_block_forward_nhwc.1} parent=5 // pred_check
      %p125 = pneg %p124
    $region22: #{basic_block_forward_nhwc.1} parent=5 // pred_check_branch
      %127 = sbr.rel (%p125) target = $region24
    $region23: #{basic_block_forward_nhwc.1} parent=5 // pred_region
      // Predicated region
      $region25: #{basic_block_forward_nhwc.1} parent=23 // pred_check
        %p128 = pneg %p29
      $region26: #{basic_block_forward_nhwc.1} parent=23 // pred_check_branch
        %130 = sbr.rel (%p128) target = $region28
      $region27: #{basic_block_forward_nhwc.1} parent=23 // pred_region
        %s131 = smul.u32 2, %s9
        %p132 = scmp.lt.s32.totalorder %s131, 3
        %s133 = scalar_select %p132, %s131, 3
        %s134 = smul.addr %s133, 8
        %s135 = scalar_lea.vmem %s0, %s134
        %s136 = smul.u32 2, %s9
      $region28: #{basic_block_forward_nhwc.1} parent=23 // pred_fallthru
        _
    $region24: #{basic_block_forward_nhwc.1} parent=5 // pred_fallthru
      _
    %p137 = scmp.le.s32.totalorder 1, %s9
    %p138 = scmp.lt.s32.totalorder %s9, 3
    %p139 = pnand %p137, %p138
    %p140 = pneg %p139
    // Predicated region
    $region29: #{basic_block_forward_nhwc.1} parent=5 // pred_check
      _
    $region30: #{basic_block_forward_nhwc.1} parent=5 // pred_check_branch
      %142 = sbr.rel (%p139) target = $region32
    $region31: #{basic_block_forward_nhwc.1} parent=5 // pred_region
      %s143 = ssub.s32 %s9, 1
      %s144 = smul.u32 2, %s14
      %p145 = scmp.lt.s32.totalorder %s144, 3
      %s146 = scalar_select %p145, %s144, 3
      %s147 = smul.addr %s146, 8
      %s148 = scalar_lea.vmem %s0, %s147
      %p149 = pneg %p35
      %p150 = pneg %p32
      %p151 = pneg %p56
      %p152 = pneg %p53
      %p153 = pneg %p77
      %p154 = pneg %p74
      %p155 = pneg %p103
      %p156 = pneg %p100
      %s157 = smul.u32 2, %s14
      %p158 = scmp.lt.s32.totalorder %s157, 3
      %s159 = scalar_select %p158, %s157, 3
      %s160 = smul.addr %s159, 8
      %s161 = scalar_lea.vmem %s3, %s160
      %s162 = smul.u32 2, %s14
      %p163 = scmp.lt.s32.totalorder %s162, 3
      %s164 = scalar_select %p163, %s162, 3
      %s165 = smul.addr %s164, 8
      %s166 = scalar_lea.vmem %s0, %s165
      %s167 = smul.u32 2, %s14
      %s168 = smul.u32 2, %s14
      %p169 = scmp.lt.s32.totalorder %s168, 3
      %s170 = scalar_select %p169, %s168, 3
      %s171 = smul.addr %s170, 8
      %s172 = scalar_lea.vmem %s3, %s171
      %s173 = smul.u32 2, %s14
      %v174 = vld [vmem:[%s166] sm:$0xff]
      %v175 = vld [vmem:[%s166 + $0x8] sm:$0xff]
      %v176 = vld [vmem:[%s1] sm:$0xff]
      %v177 = vld [vmem:[%s1 + $0x8] sm:$0xff]
      %v178 = vld [vmem:[%s1 + $0x10] sm:$0xff]
      %v179 = vld [vmem:[%s1 + $0x18] sm:$0xff]
      %v180 = vld [vmem:[%s1 + $0x20] sm:$0xff]
      %v181 = vld [vmem:[%s1 + $0x28] sm:$0xff]
      %v182 = vld [vmem:[%s1 + $0x30] sm:$0xff]
      %v183 = vld [vmem:[%s1 + $0x38] sm:$0xff]
      %v184 = vld [vmem:[%s1 + $0x40] sm:$0xff]
      %v185 = vld [vmem:[%s1 + $0x48] sm:$0xff]
      %v186 = vld [vmem:[%s1 + $0x50] sm:$0xff]
      %v187 = vld [vmem:[%s1 + $0x58] sm:$0xff]
      %v188 = vld [vmem:[%s1 + $0x60] sm:$0xff]
      %v189 = vld [vmem:[%s1 + $0x68] sm:$0xff]
      %v190 = vld [vmem:[%s1 + $0x70] sm:$0xff]
      %v191 = vld [vmem:[%s1 + $0x78] sm:$0xff]
      %v192 = vld [vmem:[%s1 + $0x80] sm:$0xff]
      %v193 = vld [vmem:[%s1 + $0x88] sm:$0xff]
      %v194 = vld [vmem:[%s1 + $0x90] sm:$0xff]
      %v195 = vld [vmem:[%s1 + $0x98] sm:$0xff]
      %v196 = vld [vmem:[%s1 + $0xa0] sm:$0xff]
      %v197 = vld [vmem:[%s1 + $0xa8] sm:$0xff]
      %v198 = vld [vmem:[%s1 + $0xb0] sm:$0xff]
      %v199 = vld [vmem:[%s1 + $0xb8] sm:$0xff]
      %s200 = scalar_lea.vmem %s1, 192
      %v201 = vld [vmem:[%s200] sm:$0xff]
      %v202 = vld [vmem:[%s200 + $0x8] sm:$0xff]
      %v203 = vld [vmem:[%s200 + $0x10] sm:$0xff]
      %v204 = vld [vmem:[%s200 + $0x18] sm:$0xff]
      %v205 = vld [vmem:[%s200 + $0x20] sm:$0xff]
      %v206 = vld [vmem:[%s200 + $0x28] sm:$0xff]
      %v207 = vld [vmem:[%s200 + $0x30] sm:$0xff]
      %v208 = vld [vmem:[%s200 + $0x38] sm:$0xff]
      %v209 = vld [vmem:[%s200 + $0x40] sm:$0xff]
      %v210 = vld [vmem:[%s200 + $0x48] sm:$0xff]
      %v211 = vld [vmem:[%s200 + $0x50] sm:$0xff]
      %v212 = vld [vmem:[%s200 + $0x58] sm:$0xff]
      %v213 = vld [vmem:[%s200 + $0x60] sm:$0xff]
      %v214 = vld [vmem:[%s200 + $0x68] sm:$0xff]
      %v215 = vld [vmem:[%s200 + $0x70] sm:$0xff]
      %v216 = vld [vmem:[%s200 + $0x78] sm:$0xff]
      %v217 = vld [vmem:[%s200 + $0x80] sm:$0xff]
      %v218 = vld [vmem:[%s200 + $0x88] sm:$0xff]
      %v219 = vld [vmem:[%s200 + $0x90] sm:$0xff]
      %v220 = vld [vmem:[%s200 + $0x98] sm:$0xff]
      %v221 = vld [vmem:[%s200 + $0xa0] sm:$0xff]
      %v222 = vld [vmem:[%s200 + $0xa8] sm:$0xff]
      %v223 = vld [vmem:[%s200 + $0xb0] sm:$0xff]
      %v224 = vld [vmem:[%s200 + $0xb8] sm:$0xff]
      %v225 = vld [vmem:[%s2] sm:$0xf]
      %v226 = vlaneseq
      %v227 = vshrl.u32 %v226, 7
      %v228 = vadd.s32 %v227, 8
      %vm229 = vcmp.lt.s32.totalorder %v227, 0
      %v230 = vsub.s32 0, %v227
      %v231 = vsel %vm229, %v230, %v227
      %v232 = vshrl.u32 %v231, 4
      %v233 = vand.u32 %v231, 15
      %v234 = vsub.s32 0, %v233
      %v235 = vsel %vm229, %v234, %v233
      %vm236 = vcmp.lt.s32.totalorder %v228, 0
      %v237 = vsub.s32 0, %v228
      %v238 = vsel %vm236, %v237, %v228
      %v239 = vshrl.u32 %v238, 4
      %v240 = vand.u32 %v238, 15
      %v241 = vsub.s32 0, %v240
      %v242 = vsel %vm236, %v241, %v240
      %vm243 = vcmp.ne.s32.totalorder %v235, 0
      %vm244 = vcmp.ne.s32.totalorder %v242, 0
      %vm245 = vcmp.lt.s32.totalorder %v235, 0
      %vm246 = vcmp.lt.s32.totalorder %v242, 0
      %vm247 = vmand %vm245, %vm243
      %vm248 = vmand %vm246, %vm244
      %v249 = vadd.s32 %v235, 16
      %v250 = vadd.s32 %v242, 16
      %v251 = vsel %vm247, %v249, %v235
      %v252 = vsel %vm248, %v250, %v242
      %vm253 = vcmp.ne.s32.totalorder %v251, 0
      %vm254 = vcmp.ne.s32.totalorder %v252, 0
      %vm255 = vcmp.ne.s32.totalorder %v251, 15
      %vm256 = vcmp.ne.s32.totalorder %v252, 15
      %v257 = vrot.slane %v174, 7
      %v258 = vrot.slane %v175, 7
      %vm259 = vcmp.lt.s32.totalorder %v227, 1
      %v260 = vsel %vm259, %v257, %v258
      %v261 = vsel %vm259, %v258, %v257
      %v262 = vsel %vm253, %v261, 0.0
      %v263 = vsel %vm254, %v260, 0.0
      %v264 = vrot.slane %v174, 1
      %v265 = vrot.slane %v175, 1
      %vm266 = vcmp.lt.s32.totalorder %v227, 7
      %v267 = vsel %vm266, %v264, %v265
      %v268 = vsel %vm266, %v265, %v264
      %v269 = vsel %vm255, %v267, 0.0
      %v270 = vsel %vm256, %v268, 0.0
      %273 = vrot.lane.b32.xlu0 %v174, 64
      %v274 = vpop.permute.xlu0 %273
      %275 = vrot.lane.b32.xlu0 %v175, 64
      %v276 = vpop.permute.xlu0 %275
      %vm279 = vcmask 523264
      %v280 = vsel %vm279, %v262, %v274
      %v281 = vsel %vm279, %v263, %v276
      %v283 = vsel %vm279, %v269, 0
      %v286 = vsel %vm279, %v270, 0
      %288 = vmatprep.subr.mxu0 0.0
      %289 = vmatpush1.msra.mxu0 %v176
      %290 = vmatprep.subr.mxu0 0.0
      %291 = vmatpush1.msra.mxu0 %v177
      %292 = vmatprep.subr.mxu0 0.0
      %293 = vmatpush1.msra.mxu0 %v178
      %294 = vmatprep.subr.mxu0 0.0
      %295 = vmatpush1.msra.mxu0 %v179
      %296 = vmatprep.subr.mxu0 0.0
      %297 = vmatpush1.msra.mxu0 %v180
      %298 = vmatprep.subr.mxu0 0.0
      %299 = vmatpush1.msra.mxu0 %v181
      %300 = vmatprep.subr.mxu0 0.0
      %301 = vmatpush1.msra.mxu0 %v182
      %302 = vmatprep.subr.mxu0 0.0
      %303 = vmatpush1.msra.mxu0 %v183
      %304 = vmatprep.subr.mxu0 0.0
      %305 = vmatpush1.msra.mxu0 %v184
      %306 = vmatprep.subr.mxu0 0.0
      %307 = vmatpush1.msra.mxu0 %v185
      %308 = vmatprep.subr.mxu0 0.0
      %309 = vmatpush1.msra.mxu0 %v186
      %310 = vmatprep.subr.mxu0 0.0
      %311 = vmatpush1.msra.mxu0 %v187
      %312 = vmatprep.subr.mxu0 0.0
      %313 = vmatpush1.msra.mxu0 %v188
      %314 = vmatprep.subr.mxu0 0.0
      %315 = vmatpush1.msra.mxu0 %v189
      %316 = vmatprep.subr.mxu0 0.0
      %317 = vmatpush1.msra.mxu0 %v190
      %318 = vmatprep.subr.mxu0 0.0
      %319 = vmatpush1.msra.mxu0 %v191
      %320 = vmatprep.subr.mxu0 0.0
      %321 = vmatpush1.msra.mxu0 %v192
      %322 = vmatprep.subr.mxu0 0.0
      %323 = vmatpush1.msra.mxu0 %v193
      %324 = vmatprep.subr.mxu0 0.0
      %325 = vmatpush1.msra.mxu0 %v194
      %326 = vmatprep.subr.mxu0 0.0
      %327 = vmatpush1.msra.mxu0 %v195
      %328 = vmatprep.subr.mxu0 0.0
      %329 = vmatpush1.msra.mxu0 %v196
      %330 = vmatprep.subr.mxu0 0.0
      %331 = vmatpush1.msra.mxu0 %v197
      %332 = vmatprep.subr.mxu0 0.0
      %333 = vmatpush1.msra.mxu0 %v198
      %334 = vmatprep.subr.mxu0 0.0
      %335 = vmatpush1.msra.mxu0 %v199
      %336 = vmatprep.subr.mxu0 0.0
      %337 = vmatpush1.msra.mxu0 0.0
      %338 = vmatprep.subr.mxu0 0.0
      %339 = vmatpush1.msra.mxu0 0.0
      %340 = vmatprep.subr.mxu0 0.0
      %341 = vmatpush1.msra.mxu0 0.0
      %342 = vmatprep.subr.mxu0 0.0
      %343 = vmatpush1.msra.mxu0 0.0
      %344 = vmatprep.subr.mxu0 0.0
      %345 = vmatpush1.msra.mxu0 0.0
      %346 = vmatprep.subr.mxu0 0.0
      %347 = vmatpush1.msra.mxu0 0.0
      %348 = vmatprep.subr.mxu0 0.0
      %349 = vmatpush1.msra.mxu0 0.0
      %350 = vmatprep.subr.mxu0 0.0
      %351 = vmatpush1.msra.mxu0 0.0
      %352 = vmatprep.mubr.f32.mxu0 %v283
      %353 = vmatmul.mubr.f32.gmra.mrb[0].mxu0 %v280
      %v354 = vpop.f32.mrb[0].mxu0
      %v355 = vadd.f32 0.0, %v354
      %v356 = vpop.f32.mrb[0].mxu0
      %357 = vmatprep.mubr.f32.mxu0 %v286
      %358 = vmatmul.mubr.f32.gmra.mrb[0].mxu0 %v281
      %v359 = vpop.f32.mrb[0].mxu0
      %v360 = vadd.f32 0.0, %v359
      %v361 = vpop.f32.mrb[0].mxu0
      %362 = vdwg.mxu0
      %v363 = vlaneseq
      %v364 = vshrl.u32 %v363, 7
      %v365 = vsub.s32 0, %v364
      %v366 = vrot.slane %v225, %v365
      %v367 = vmul.f32 %v355, %v366
      %v368 = vmul.f32 %v360, %v366
      %v369 = vlaneseq
      %v370 = vshrl.u32 %v369, 7
      %v371 = vsub.s32 1, %v370
      %v372 = vrot.slane %v225, %v371
      %v373 = vadd.f32 %v367, %v372
      %v374 = vadd.f32 %v368, %v372
      %v375 = vmax.f32 %v373, 0.0
      %v376 = vmax.f32 %v374, 0.0
      %v377 = vrot.slane %v375, 7
      %v378 = vrot.slane %v376, 7
      %v379 = vsel %vm259, %v377, %v378
      %v380 = vsel %vm259, %v378, %v377
      %v381 = vsel %vm253, %v380, 0.0
      %v382 = vsel %vm254, %v379, 0.0
      %v383 = vrot.slane %v375, 1
      %v384 = vrot.slane %v376, 1
      %v385 = vsel %vm266, %v383, %v384
      %v386 = vsel %vm266, %v384, %v383
      %v387 = vsel %vm255, %v385, 0.0
      %v388 = vsel %vm256, %v386, 0.0
      %391 = vrot.lane.b32.xlu0 %v375, 64
      %v392 = vpop.permute.xlu0 %391
      %393 = vrot.lane.b32.xlu0 %v376, 64
      %v394 = vpop.permute.xlu0 %393
      %v397 = vsel %vm279, %v381, %v392
      %v398 = vsel %vm279, %v382, %v394
      %v400 = vsel %vm279, %v387, 0
      %v403 = vsel %vm279, %v388, 0
      %405 = vmatprep.subr.mxu0 0.0
      %406 = vmatpush1.msra.mxu0 %v201
      %407 = vmatprep.subr.mxu0 0.0
      %408 = vmatpush1.msra.mxu0 %v202
      %409 = vmatprep.subr.mxu0 0.0
      %410 = vmatpush1.msra.mxu0 %v203
      %411 = vmatprep.subr.mxu0 0.0
      %412 = vmatpush1.msra.mxu0 %v204
      %413 = vmatprep.subr.mxu0 0.0
      %414 = vmatpush1.msra.mxu0 %v205
      %415 = vmatprep.subr.mxu0 0.0
      %416 = vmatpush1.msra.mxu0 %v206
      %417 = vmatprep.subr.mxu0 0.0
      %418 = vmatpush1.msra.mxu0 %v207
      %419 = vmatprep.subr.mxu0 0.0
      %420 = vmatpush1.msra.mxu0 %v208
      %421 = vmatprep.subr.mxu0 0.0
      %422 = vmatpush1.msra.mxu0 %v209
      %423 = vmatprep.subr.mxu0 0.0
      %424 = vmatpush1.msra.mxu0 %v210
      %425 = vmatprep.subr.mxu0 0.0
      %426 = vmatpush1.msra.mxu0 %v211
      %427 = vmatprep.subr.mxu0 0.0
      %428 = vmatpush1.msra.mxu0 %v212
      %429 = vmatprep.subr.mxu0 0.0
      %430 = vmatpush1.msra.mxu0 %v213
      %431 = vmatprep.subr.mxu0 0.0
      %432 = vmatpush1.msra.mxu0 %v214
      %433 = vmatprep.subr.mxu0 0.0
      %434 = vmatpush1.msra.mxu0 %v215
      %435 = vmatprep.subr.mxu0 0.0
      %436 = vmatpush1.msra.mxu0 %v216
      %437 = vmatprep.subr.mxu0 0.0
      %438 = vmatpush1.msra.mxu0 %v217
      %439 = vmatprep.subr.mxu0 0.0
      %440 = vmatpush1.msra.mxu0 %v218
      %441 = vmatprep.subr.mxu0 0.0
      %442 = vmatpush1.msra.mxu0 %v219
      %443 = vmatprep.subr.mxu0 0.0
      %444 = vmatpush1.msra.mxu0 %v220
      %445 = vmatprep.subr.mxu0 0.0
      %446 = vmatpush1.msra.mxu0 %v221
      %447 = vmatprep.subr.mxu0 0.0
      %448 = vmatpush1.msra.mxu0 %v222
      %449 = vmatprep.subr.mxu0 0.0
      %450 = vmatpush1.msra.mxu0 %v223
      %451 = vmatprep.subr.mxu0 0.0
      %452 = vmatpush1.msra.mxu0 %v224
      %453 = vmatprep.subr.mxu0 0.0
      %454 = vmatpush1.msra.mxu0 0.0
      %455 = vmatprep.subr.mxu0 0.0
      %456 = vmatpush1.msra.mxu0 0.0
      %457 = vmatprep.subr.mxu0 0.0
      %458 = vmatpush1.msra.mxu0 0.0
      %459 = vmatprep.subr.mxu0 0.0
      %460 = vmatpush1.msra.mxu0 0.0
      %461 = vmatprep.subr.mxu0 0.0
      %462 = vmatpush1.msra.mxu0 0.0
      %463 = vmatprep.subr.mxu0 0.0
      %464 = vmatpush1.msra.mxu0 0.0
      %465 = vmatprep.subr.mxu0 0.0
      %466 = vmatpush1.msra.mxu0 0.0
      %467 = vmatprep.subr.mxu0 0.0
      %468 = vmatpush1.msra.mxu0 0.0
      %469 = vmatprep.mubr.f32.mxu0 %v400
      %470 = vmatmul.mubr.f32.gmra.mrb[0].mxu0 %v397
      %v471 = vpop.f32.mrb[0].mxu0
      %v472 = vadd.f32 0.0, %v471
      %v473 = vpop.f32.mrb[0].mxu0
      %474 = vmatprep.mubr.f32.mxu0 %v403
      %475 = vmatmul.mubr.f32.gmra.mrb[0].mxu0 %v398
      %v476 = vpop.f32.mrb[0].mxu0
      %v477 = vadd.f32 0.0, %v476
      %v478 = vpop.f32.mrb[0].mxu0
      %479 = vdwg.mxu0
      %v480 = vlaneseq
      %v481 = vshrl.u32 %v480, 7
      %v482 = vsub.s32 2, %v481
      %v483 = vrot.slane %v225, %v482
      %v484 = vmul.f32 %v472, %v483
      %v485 = vmul.f32 %v477, %v483
      %v486 = vlaneseq
      %v487 = vshrl.u32 %v486, 7
      %v488 = vsub.s32 3, %v487
      %v489 = vrot.slane %v225, %v488
      %v490 = vadd.f32 %v484, %v489
      %v491 = vadd.f32 %v485, %v489
      %v492 = vadd.f32 %v490, %v174
      %v493 = vadd.f32 %v491, %v175
      %v494 = vmax.f32 %v492, 0.0
      %v495 = vmax.f32 %v493, 0.0
      %496 = vst.msk [vmem:[%s172] sm:$0xff] %vm279, %v494
      %497 = vst.msk [vmem:[%s172 + $0x8] sm:$0xff] %vm279, %v495
      %s498 = smul.u32 2, %s14
      %p499 = scmp.lt.s32.totalorder %s498, 3
      %s500 = scalar_select %p499, %s498, 3
      %s501 = smul.addr %s500, 8
      %s502 = scalar_lea.vmem %s3, %s501
      // Predicated region
      $region33: #{basic_block_forward_nhwc.1} parent=31 // pred_check
        %p503 = pneg %p100
      $region34: #{basic_block_forward_nhwc.1} parent=31 // pred_check_branch
        %505 = sbr.rel (%p503) target = $region36
      $region35: #{basic_block_forward_nhwc.1} parent=31 // pred_region
        %s506 = smul.u32 2, %s14
      $region36: #{basic_block_forward_nhwc.1} parent=31 // pred_fallthru
        _
    $region32: #{basic_block_forward_nhwc.1} parent=5 // pred_fallthru
      _
    %p507 = scmp.le.s32.totalorder 2, %s9
    // Predicated region
    $region37: #{basic_block_forward_nhwc.1} parent=5 // pred_check
      %p508 = pneg %p507
    $region38: #{basic_block_forward_nhwc.1} parent=5 // pred_check_branch
      %510 = sbr.rel (%p508) target = $region40
    $region39: #{basic_block_forward_nhwc.1} parent=5 // pred_region
      %s511 = ssub.s32 %s9, 2
      // Predicated region
      $region41: #{basic_block_forward_nhwc.1} parent=39 // pred_check
        %p512 = pneg %p106
      $region42: #{basic_block_forward_nhwc.1} parent=39 // pred_check_branch
        %514 = sbr.rel (%p512) target = $region44
      $region43: #{basic_block_forward_nhwc.1} parent=39 // pred_region
        %s515 = smul.u32 2, %s15
        %p516 = scmp.lt.s32.totalorder %s515, 3
        %s517 = scalar_select %p516, %s515, 3
        %s518 = smul.addr %s517, 8
        %s519 = scalar_lea.vmem %s3, %s518
      $region44: #{basic_block_forward_nhwc.1} parent=39 // pred_fallthru
        _
    $region40: #{basic_block_forward_nhwc.1} parent=5 // pred_fallthru
      _
  $region6: #{basic_block_forward_nhwc.1} parent=0 // loop_footer
    %s13 = sadd.s32 1, %s9
  $region7: #{basic_block_forward_nhwc.1} parent=0 // loop_footer_branch
    %8 = sbr.rel target = $region3
  $region8: #{basic_block_forward_nhwc.1} parent=0 // loop_exit
    _

</llo_original>
